<compile_context>
chip_gen: v7x
topology: tpu7x:2x2x1
jax: 0.10.0
libtpu: 0.0.40
codegen_flags: <defaults>
</compile_context>

<pallas_src>
import jax
import jax.numpy as jnp
from jax.experimental import pallas as pl
from jax.experimental.pallas import tpu as pltpu


# ----------------------------------------------------------------------------
# Kernel body: hidden = relu(x @ W1 + b1); out = hidden @ W2 + b2
# ----------------------------------------------------------------------------
def _mlp_kernel(x_ref, w1_ref, b1_ref, w2_ref, b2_ref, o_ref):
    h = jnp.dot(x_ref[...], w1_ref[...], preferred_element_type=jnp.float32)
    h = jnp.maximum(h + b1_ref[...], 0.0)
    y = jnp.dot(h.astype(w2_ref.dtype), w2_ref[...],
                preferred_element_type=jnp.float32)
    o_ref[...] = (y + b2_ref[...]).astype(o_ref.dtype)


# ----------------------------------------------------------------------------
# Helpers
# ----------------------------------------------------------------------------
def _round_up(x, m):
    return ((x + m - 1) // m) * m


def _pad_2d(a, rows, cols):
    """Zero-pad a 2-D array up to (rows, cols); no-op if already that shape."""
    r, c = a.shape
    if r == rows and c == cols:
        return a
    return jnp.zeros((rows, cols), a.dtype).at[:r, :c].set(a)


def pad_linear_qnet_params(w1, b1, w2, b2):
    """Pad params to lane-dense shapes ONCE (call at init, reuse every forward).

    w1: (in, hid)  b1: (1, hid)   w2: (hid, out)  b2: (1, out)
    Returns (w1_p, b1_p, w2_p, b2_p, out_size) with hid/out rounded up to 128.
    Zero padding is math-preserving: relu(0 + 0) = 0 and zero rows/cols of W2
    contribute nothing to the true output columns.
    """
    in_size, hid_size = w1.shape
    out_size = w2.shape[1]
    hid_p = _round_up(hid_size, 128)
    out_p = _round_up(out_size, 128)
    w1_p = _pad_2d(w1, in_size, hid_p)                      # keep K = in_size
    b1_p = _pad_2d(b1.reshape(1, hid_size), 1, hid_p)
    w2_p = _pad_2d(w2, hid_p, out_p)
    b2_p = _pad_2d(b2.reshape(1, out_size), 1, out_p)
    return w1_p, b1_p, w2_p, b2_p, out_size


# ----------------------------------------------------------------------------
# Forward wrapper
# ----------------------------------------------------------------------------
def linear_qnet_forward(x, w1_p, b1_p, w2_p, b2_p, out_size, *, max_tile_b=2048):
    """Fused Linear_QNet forward as a single Pallas call.

    x     : (B, input_size), un-padded.
    w*_p  : pre-padded params from pad_linear_qnet_params().
    Returns (B, out_size), same dtype as x.
    """
    B, in_size = x.shape
    hid_p = w1_p.shape[1]
    out_p = w2_p.shape[1]
    dtype = x.dtype
    itemsize = jnp.dtype(dtype).itemsize
    sublane = 16 if dtype == jnp.bfloat16 else 8

    # Batch tile: aim for >= 2 grid steps on big batches (v7x megacore gets
    # both TensorCores busy), but a single step for tiny inference batches.
    tb = _round_up(max((B + 1) // 2, sublane), sublane)
    tb = _round_up(min(tb, max_tile_b), sublane)
    grid_b = -(-B // tb)                                    # cdiv(B, tb)

    # Advisory cost estimate (actual padded-hidden work, actual bytes moved).
    flops = 2 * B * (in_size * hid_p + hid_p * out_p)
    bytes_accessed = itemsize * (x.size + w1_p.size + b1_p.size +
                                 w2_p.size + b2_p.size + B * out_p)

    out = pl.pallas_call(
        _mlp_kernel,
        out_shape=jax.ShapeDtypeStruct((B, out_p), dtype),
        grid_spec=pltpu.PrefetchScalarGridSpec(
            num_scalar_prefetch=0,
            grid=(grid_b,),
            in_specs=[
                # x: tiled over batch, full (un-padded) feature lane dim.
                pl.BlockSpec((tb, in_size), lambda i: (i, 0)),
                # Weights / biases: VMEM-resident across the whole grid.
                pl.BlockSpec((in_size, hid_p), lambda i: (0, 0)),
                pl.BlockSpec((1, hid_p), lambda i: (0, 0)),
                pl.BlockSpec((hid_p, out_p), lambda i: (0, 0)),
                pl.BlockSpec((1, out_p), lambda i: (0, 0)),
            ],
            # Lane-dense output store (out_p is a multiple of 128).
            out_specs=pl.BlockSpec((tb, out_p), lambda i: (i, 0)),
        ),
        compiler_params=pltpu.CompilerParams(
            dimension_semantics=("parallel",)),
        cost_estimate=pl.CostEstimate(flops=flops, transcendentals=0,
                                      bytes_accessed=bytes_accessed),
    )(x, w1_p, b1_p, w2_p, b2_p)

    # Drop the zero-padded feature columns outside the kernel.
    return out[:, :out_size]


def init_linear_qnet_params(key, input_size, hidden_size, output_size,
                            dtype=jnp.float32):
    """Deterministic init matching nn.Linear's U(-1/sqrt(fan_in), +1/sqrt(fan_in))."""
    k1, k2, k3, k4 = jax.random.split(key, 4)
    lim1 = 1.0 / (input_size ** 0.5)
    lim2 = 1.0 / (hidden_size ** 0.5)
    w1 = jax.random.uniform(k1, (input_size, hidden_size), dtype, -lim1, lim1)
    b1 = jax.random.uniform(k2, (1, hidden_size), dtype, -lim1, lim1)
    w2 = jax.random.uniform(k3, (hidden_size, output_size), dtype, -lim2, lim2)
    b2 = jax.random.uniform(k4, (1, output_size), dtype, -lim2, lim2)
    return w1, b1, w2, b2


# TODO(synk): Linear_QNet.save() is host-side torch checkpoint I/O, not a
# kernel concern; no Pallas equivalent implemented.

if __name__ == "__main__":
    # Shapes typical for the snake-game Q-net: 11 -> 32 -> 3.
    input_size, hidden_size, output_size = 11, 32, 3

    key = jax.random.PRNGKey(0)
    kx, kp, kx2 = jax.random.split(key, 3)
    w1, b1, w2, b2 = init_linear_qnet_params(kp, input_size, hidden_size,
                                             output_size)

    # Pad weights ONCE (hot loop reuses the padded params).
    w1_p, b1_p, w2_p, b2_p, osz = pad_linear_qnet_params(w1, b1, w2, b2)

    def ref_fwd(x):
        return jnp.maximum(x @ w1 + b1, 0.0) @ w2 + b2

    # Case 1: small inference batch (aligned, single grid step).
    x = jax.random.normal(kx, (8, input_size), dtype=jnp.float32)
    out = jax.block_until_ready(
        linear_qnet_forward(x, w1_p, b1_p, w2_p, b2_p, osz))
    assert out.shape == (8, output_size)
    assert jnp.allclose(out, ref_fwd(x), atol=1e-5, rtol=1e-5)

    # Case 2: replay-buffer style batch, not a multiple of 8 (exercises the
    # partial last block and the 2-step batch grid).
    x2 = jax.random.normal(kx2, (100, input_size), dtype=jnp.float32)
    out2 = jax.block_until_ready(
        linear_qnet_forward(x2, w1_p, b1_p, w2_p, b2_p, osz))
    assert out2.shape == (100, output_size)
    assert jnp.allclose(out2, ref_fwd(x2), atol=1e-5, rtol=1e-5)

    print("KERNEL_OK")
</pallas_src>

<mosaic_0001>
module attributes {stable_mosaic.version = 11 : i64} {
  func.func @_mlp_kernel(%arg0: i32, %arg1: memref<8x11xf32, #tpu.memory_space<vmem>>, %arg2: memref<11x128xf32, #tpu.memory_space<vmem>>, %arg3: memref<1x128xf32, #tpu.memory_space<vmem>>, %arg4: memref<128x128xf32, #tpu.memory_space<vmem>>, %arg5: memref<1x128xf32, #tpu.memory_space<vmem>>, %arg6: memref<8x128xf32, #tpu.memory_space<vmem>>) attributes {dimension_semantics = [#tpu.dimension_semantics<parallel>], iteration_bounds = array<i64: 1>, scalar_prefetch = 0 : i64, scratch_operands = 0 : i64, tpu.core_type = #tpu.core_type<tc>, window_params = [{transform_indices = @transform_0, window_bounds = array<i64: 8, 11>}, {pipeline_mode = #tpu.pipeline_mode<synchronous>, transform_indices = @transform_1, window_bounds = array<i64: 11, 128>}, {pipeline_mode = #tpu.pipeline_mode<synchronous>, transform_indices = @transform_2, window_bounds = array<i64: 1, 128>}, {pipeline_mode = #tpu.pipeline_mode<synchronous>, transform_indices = @transform_3, window_bounds = array<i64: 128, 128>}, {pipeline_mode = #tpu.pipeline_mode<synchronous>, transform_indices = @transform_4, window_bounds = array<i64: 1, 128>}, {transform_indices = @transform_5, window_bounds = array<i64: 8, 128>}]} {
    %c0 = arith.constant 0 : index
    %c0_0 = arith.constant 0 : index
    %0 = vector.load %arg1[%c0, %c0_0] : memref<8x11xf32, #tpu.memory_space<vmem>>, vector<8x11xf32>
    %c0_1 = arith.constant 0 : index
    %c0_2 = arith.constant 0 : index
    %1 = vector.load %arg2[%c0_1, %c0_2] : memref<11x128xf32, #tpu.memory_space<vmem>>, vector<11x128xf32>
    %cst = arith.constant dense<0.000000e+00> : vector<8x128xf32>
    %2 = tpu.matmul %0, %1, %cst {dimension_numbers = #tpu.dot_dimension_numbers<[1], [0], [0], [1], [0, 0, 1, 1], [], []>} : vector<8x11xf32>, vector<11x128xf32>, vector<8x128xf32> -> vector<8x128xf32>
    %c0_3 = arith.constant 0 : index
    %c0_4 = arith.constant 0 : index
    %3 = vector.load %arg3[%c0_3, %c0_4] : memref<1x128xf32, #tpu.memory_space<vmem>>, vector<1x128xf32>
    %4 = vector.broadcast %3 : vector<1x128xf32> to vector<8x128xf32>
    %5 = arith.addf %2, %4 : vector<8x128xf32>
    %cst_5 = arith.constant 0.000000e+00 : f32
    %6 = vector.broadcast %cst_5 : f32 to vector<8x128xf32>
    %7 = arith.maximumf %5, %6 : vector<8x128xf32>
    %c0_6 = arith.constant 0 : index
    %c0_7 = arith.constant 0 : index
    %8 = vector.load %arg4[%c0_6, %c0_7] : memref<128x128xf32, #tpu.memory_space<vmem>>, vector<128x128xf32>
    %cst_8 = arith.constant dense<0.000000e+00> : vector<8x128xf32>
    %9 = tpu.matmul %7, %8, %cst_8 {dimension_numbers = #tpu.dot_dimension_numbers<[1], [0], [0], [1], [0, 0, 1, 1], [], []>} : vector<8x128xf32>, vector<128x128xf32>, vector<8x128xf32> -> vector<8x128xf32>
    %c0_9 = arith.constant 0 : index
    %c0_10 = arith.constant 0 : index
    %10 = vector.load %arg5[%c0_9, %c0_10] : memref<1x128xf32, #tpu.memory_space<vmem>>, vector<1x128xf32>
    %11 = vector.broadcast %10 : vector<1x128xf32> to vector<8x128xf32>
    %12 = arith.addf %9, %11 : vector<8x128xf32>
    %c0_11 = arith.constant 0 : index
    %c0_12 = arith.constant 0 : index
    %13 = vector.load %arg6[%c0_11, %c0_12] : memref<8x128xf32, #tpu.memory_space<vmem>>, vector<8x128xf32>
    tpu.vector_store %arg6[%c0_11, %c0_12], %12 {strides = array<i32>} : memref<8x128xf32, #tpu.memory_space<vmem>>, vector<8x128xf32>,
    return
  }
  func.func @transform_0(%arg0: i32) -> (i32, i32) {
    %c0_i32 = arith.constant 0 : i32
    %c0_i32_0 = arith.constant 0 : i32
    return %arg0, %c0_i32 : i32, i32
  }
  func.func @transform_1(%arg0: i32) -> (i32, i32) {
    %c0_i32 = arith.constant 0 : i32
    %c0_i32_0 = arith.constant 0 : i32
    %c0_i32_1 = arith.constant 0 : i32
    return %c0_i32, %c0_i32_0 : i32, i32
  }
  func.func @transform_2(%arg0: i32) -> (i32, i32) {
    %c0_i32 = arith.constant 0 : i32
    %c0_i32_0 = arith.constant 0 : i32
    %c0_i32_1 = arith.constant 0 : i32
    return %c0_i32, %c0_i32_0 : i32, i32
  }
  func.func @transform_3(%arg0: i32) -> (i32, i32) {
    %c0_i32 = arith.constant 0 : i32
    %c0_i32_0 = arith.constant 0 : i32
    %c0_i32_1 = arith.constant 0 : i32
    return %c0_i32, %c0_i32_0 : i32, i32
  }
  func.func @transform_4(%arg0: i32) -> (i32, i32) {
    %c0_i32 = arith.constant 0 : i32
    %c0_i32_0 = arith.constant 0 : i32
    %c0_i32_1 = arith.constant 0 : i32
    return %c0_i32, %c0_i32_0 : i32, i32
  }
  func.func @transform_5(%arg0: i32) -> (i32, i32) {
    %c0_i32 = arith.constant 0 : i32
    %c0_i32_0 = arith.constant 0 : i32
    return %arg0, %c0_i32 : i32, i32
  }
}

</mosaic_0001>

<llo_original>
// kernel: tpu_custom_call.1
$region0: #{tpu_custom_call.1}
  #allocation0 [shape = 'u32[]', space=smem, size = 0x4, offset = 0x4, fixed_abs, tag = 'smem constant byte address 0x4 - core index']
  #allocation1 [shape = 'u32[144,128]{1,0:T(1,128)}', space=vmem, size = 0x12000, scoped, tag = 'internal scratch']
  %s0 = inlined_call_operand.hbm [shape: f32[8,11], index: 0, kind: input, shape index: {}]
  %s1 = inlined_call_operand.hbm [shape: f32[11,128], index: 1, kind: input, shape index: {}]
  %s2 = inlined_call_operand.vmem [shape: f32[1,128], index: 2, kind: input, shape index: {}]
  %s3 = inlined_call_operand.hbm [shape: f32[128,128], index: 3, kind: input, shape index: {}]
  %s4 = inlined_call_operand.vmem [shape: f32[1,128], index: 4, kind: input, shape index: {}]
  %s5 = inlined_call_operand.hbm [shape: f32[8,128], index: 5, kind: output, shape index: {}]
  %s6 = sld [smem:[#allocation0]]
  $region42: #{tpu_custom_call.1} parent=0
    _
  %s8 = ssub.s32 1, %s6
  %s9 = scalar_select 0, %s8, %s6
  $region1: #{tpu_custom_call.1} parent=0
    #allocation2 [shape = 'u8[4096]{0}', space=vmem, size = 0x1000, scoped, tag = 'input window, operand 0, single buffered']
    #allocation3 [shape = 's32[1]{0}', space=sflag, size = 0x4, scoped, tag = 'scoped memory for tpu_custom_call.1']
    #allocation4 [shape = 's32[1]{0}', space=sflag, size = 0x4, scoped, tag = 'scoped memory for tpu_custom_call.1']
    #allocation5 [shape = 'u8[8192]{0}', space=vmem, size = 0x2000, scoped, tag = 'input window, operand 1, single buffered']
    #allocation6 [shape = 's32[1]{0}', space=sflag, size = 0x4, scoped, tag = 'scoped memory for tpu_custom_call.1']
    #allocation7 [shape = 'u8[65536]{0}', space=vmem, size = 0x10000, scoped, tag = 'input window, operand 3, single buffered']
    #allocation8 [shape = 'u8[4096]{0}', space=vmem, size = 0x1000, scoped, tag = 'output window, operand 0, single buffered']
    %10 = vsyncpa [#allocation3], 0
    %11 = vsyncpa [#allocation6], 0
    %12 = vsyncpa [#allocation4], 0
    // Predicated region
    $region2: #{tpu_custom_call.1} parent=1 // pred_check
      _
    $region3: #{tpu_custom_call.1} parent=1 // pred_check_branch
      %14 = sbr.rel (0) target = $region5
    $region4: #{tpu_custom_call.1} parent=1 // pred_region
      %s16 = ssub.s32 128, 128
      %17 = vsyncadd [#allocation3], %s16
      %s19 = sshll.u32 [#allocation2], 4
      %s20 = int_to_ptr.vmem [resolvable:$true] %s19
      %22 = dma.hbm_to_vmem [thread:$0]  %s0, 128, %s20, [#allocation3]
    $region5: #{tpu_custom_call.1} parent=1 // pred_fallthru
      _
    // Predicated region
    $region6: #{tpu_custom_call.1} parent=1 // pred_check
      _
    $region7: #{tpu_custom_call.1} parent=1 // pred_check_branch
      %24 = sbr.rel (0) target = $region9
    $region8: #{tpu_custom_call.1} parent=1 // pred_region
      %s26 = ssub.s32 256, 256
      %27 = vsyncadd [#allocation6], %s26
      %s28 = sshll.u32 [#allocation5], 4
      %s29 = int_to_ptr.vmem [resolvable:$true] %s28
      %34 = dma.hbm_to_vmem [thread:$0]  %s1, 256, %s29, [#allocation6], 128, 128, 8
    $region9: #{tpu_custom_call.1} parent=1 // pred_fallthru
      _
    // Predicated region
    $region10: #{tpu_custom_call.1} parent=1 // pred_check
      _
    $region11: #{tpu_custom_call.1} parent=1 // pred_check_branch
      %36 = sbr.rel (0) target = $region13
    $region12: #{tpu_custom_call.1} parent=1 // pred_region
      _
    $region13: #{tpu_custom_call.1} parent=1 // pred_fallthru
      _
    // Predicated region
    $region14: #{tpu_custom_call.1} parent=1 // pred_check
      _
    $region15: #{tpu_custom_call.1} parent=1 // pred_check_branch
      %38 = sbr.rel (0) target = $region17
    $region16: #{tpu_custom_call.1} parent=1 // pred_region
      %s40 = ssub.s32 2048, 2048
      %41 = vsyncadd [#allocation6], %s40
      %s42 = sshll.u32 [#allocation7], 4
      %s43 = int_to_ptr.vmem [resolvable:$true] %s42
      %48 = dma.hbm_to_vmem [thread:$0]  %s3, 2048, %s43, [#allocation6], 128, 128, 8
    $region17: #{tpu_custom_call.1} parent=1 // pred_fallthru
      _
    // Predicated region
    $region18: #{tpu_custom_call.1} parent=1 // pred_check
      _
    $region19: #{tpu_custom_call.1} parent=1 // pred_check_branch
      %50 = sbr.rel (0) target = $region21
    $region20: #{tpu_custom_call.1} parent=1 // pred_region
      _
    $region21: #{tpu_custom_call.1} parent=1 // pred_fallthru
      _
    // Predicated region
    $region22: #{tpu_custom_call.1} parent=1 // pred_check
      _
    $region23: #{tpu_custom_call.1} parent=1 // pred_check_branch
      %52 = sbr.rel (0) target = $region25
    $region24: #{tpu_custom_call.1} parent=1 // pred_region
      %53 = dma.done [#allocation3], 128
    $region25: #{tpu_custom_call.1} parent=1 // pred_fallthru
      _
    // Predicated region
    $region26: #{tpu_custom_call.1} parent=1 // pred_check
      _
    $region27: #{tpu_custom_call.1} parent=1 // pred_check_branch
      %55 = sbr.rel (0) target = $region29
    $region28: #{tpu_custom_call.1} parent=1 // pred_region
      %56 = dma.done [#allocation6], 256
    $region29: #{tpu_custom_call.1} parent=1 // pred_fallthru
      _
    // Predicated region
    $region30: #{tpu_custom_call.1} parent=1 // pred_check
      _
    $region31: #{tpu_custom_call.1} parent=1 // pred_check_branch
      %58 = sbr.rel (0) target = $region33
    $region32: #{tpu_custom_call.1} parent=1 // pred_region
      %59 = dma.done [#allocation6], 2048
    $region33: #{tpu_custom_call.1} parent=1 // pred_fallthru
      _
    %v60 = vld [vmem:[#allocation2] sm:$0xff]
    %v61 = vld [vmem:[#allocation5] sm:$0xff]
    %v62 = vld [vmem:[#allocation5 + $0x8] sm:$0x7]
    %v63 = vld [vmem:[%s2] sm:$0x1]
    %v65 = vlaneseq
    %v66 = vshrl.u32 %v65, 7
    %v67 = vsub.s32 0, %v66
    %v68 = vrot.slane %v63, %v67
    %vm70 = vcmask 89088
    %v72 = vsel %vm70, %v60, 0
    %vm74 = vcmask 1042432
    %v76 = vsel %vm74, %v62, 0
    %78 = vmatprep.subr.mxu0 0.0
    %79 = vmatpush1.msra.mxu0 %v61
    %80 = vmatprep.subr.mxu0 0.0
    %81 = vmatpush1.msra.mxu0 %v76
    %82 = vmatprep.subr.mxu0 0.0
    %83 = vmatpush1.msra.mxu0 0.0
    %84 = vmatprep.subr.mxu0 0.0
    %85 = vmatpush1.msra.mxu0 0.0
    %86 = vmatprep.subr.mxu0 0.0
    %87 = vmatpush1.msra.mxu0 0.0
    %88 = vmatprep.subr.mxu0 0.0
    %89 = vmatpush1.msra.mxu0 0.0
    %90 = vmatprep.subr.mxu0 0.0
    %91 = vmatpush1.msra.mxu0 0.0
    %92 = vmatprep.subr.mxu0 0.0
    %93 = vmatpush1.msra.mxu0 0.0
    %94 = vmatprep.subr.mxu0 0.0
    %95 = vmatpush1.msra.mxu0 0.0
    %96 = vmatprep.subr.mxu0 0.0
    %97 = vmatpush1.msra.mxu0 0.0
    %98 = vmatprep.subr.mxu0 0.0
    %99 = vmatpush1.msra.mxu0 0.0
    %100 = vmatprep.subr.mxu0 0.0
    %101 = vmatpush1.msra.mxu0 0.0
    %102 = vmatprep.subr.mxu0 0.0
    %103 = vmatpush1.msra.mxu0 0.0
    %104 = vmatprep.subr.mxu0 0.0
    %105 = vmatpush1.msra.mxu0 0.0
    %106 = vmatprep.subr.mxu0 0.0
    %107 = vmatpush1.msra.mxu0 0.0
    %108 = vmatprep.subr.mxu0 0.0
    %109 = vmatpush1.msra.mxu0 0.0
    %110 = vmatprep.subr.mxu0 0.0
    %111 = vmatpush1.msra.mxu0 0.0
    %112 = vmatprep.subr.mxu0 0.0
    %113 = vmatpush1.msra.mxu0 0.0
    %114 = vmatprep.subr.mxu0 0.0
    %115 = vmatpush1.msra.mxu0 0.0
    %116 = vmatprep.subr.mxu0 0.0
    %117 = vmatpush1.msra.mxu0 0.0
    %118 = vmatprep.subr.mxu0 0.0
    %119 = vmatpush1.msra.mxu0 0.0
    %120 = vmatprep.subr.mxu0 0.0
    %121 = vmatpush1.msra.mxu0 0.0
    %122 = vmatprep.subr.mxu0 0.0
    %123 = vmatpush1.msra.mxu0 0.0
    %124 = vmatprep.subr.mxu0 0.0
    %125 = vmatpush1.msra.mxu0 0.0
    %126 = vmatprep.subr.mxu0 0.0
    %127 = vmatpush1.msra.mxu0 0.0
    %128 = vmatprep.subr.mxu0 0.0
    %129 = vmatpush1.msra.mxu0 0.0
    %130 = vmatprep.subr.mxu0 0.0
    %131 = vmatpush1.msra.mxu0 0.0
    %132 = vmatprep.subr.mxu0 0.0
    %133 = vmatpush1.msra.mxu0 0.0
    %134 = vmatprep.subr.mxu0 0.0
    %135 = vmatpush1.msra.mxu0 0.0
    %136 = vmatprep.subr.mxu0 0.0
    %137 = vmatpush1.msra.mxu0 0.0
    %138 = vmatprep.subr.mxu0 0.0
    %139 = vmatpush1.msra.mxu0 0.0
    %140 = vmatprep.subr.mxu0 0.0
    %141 = vmatpush1.msra.mxu0 0.0
    %142 = vmatprep.mubr.f32.mxu0 0.0
    %143 = vmatmul.mubr.f32.gmra.mrb[0].mxu0 %v72
    %v144 = vpop.f32.mrb[0].mxu0
    %v145 = vadd.f32 %v68, %v144
    %v146 = vpop.f32.mrb[0].mxu0
    %147 = vdwg.mxu0
    %v148 = vmax.f32 %v145, 0.0
    %v149 = vld [vmem:[#allocation7] sm:$0xff]
    %v150 = vld [vmem:[#allocation7 + $0x8] sm:$0xff]
    %v151 = vld [vmem:[#allocation7 + $0x10] sm:$0xff]
    %v152 = vld [vmem:[#allocation7 + $0x18] sm:$0xff]
    %v153 = vld [vmem:[#allocation7 + $0x20] sm:$0xff]
    %v154 = vld [vmem:[#allocation7 + $0x28] sm:$0xff]
    %v155 = vld [vmem:[#allocation7 + $0x30] sm:$0xff]
    %v156 = vld [vmem:[#allocation7 + $0x38] sm:$0xff]
    %v157 = vld [vmem:[#allocation7 + $0x40] sm:$0xff]
    %v158 = vld [vmem:[#allocation7 + $0x48] sm:$0xff]
    %v159 = vld [vmem:[#allocation7 + $0x50] sm:$0xff]
    %v160 = vld [vmem:[#allocation7 + $0x58] sm:$0xff]
    %v161 = vld [vmem:[#allocation7 + $0x60] sm:$0xff]
    %v162 = vld [vmem:[#allocation7 + $0x68] sm:$0xff]
    %v163 = vld [vmem:[#allocation7 + $0x70] sm:$0xff]
    %v164 = vld [vmem:[#allocation7 + $0x78] sm:$0xff]
    %v165 = vld [vmem:[%s4] sm:$0x1]
    %v167 = vlaneseq
    %v168 = vshrl.u32 %v167, 7
    %v169 = vsub.s32 0, %v168
    %v170 = vrot.slane %v165, %v169
    %172 = vmatprep.subr.mxu0 0.0
    %173 = vmatpush1.msra.mxu0 %v149
    %174 = vmatprep.subr.mxu0 0.0
    %175 = vmatpush1.msra.mxu0 %v150
    %176 = vmatprep.subr.mxu0 0.0
    %177 = vmatpush1.msra.mxu0 %v151
    %178 = vmatprep.subr.mxu0 0.0
    %179 = vmatpush1.msra.mxu0 %v152
    %180 = vmatprep.subr.mxu0 0.0
    %181 = vmatpush1.msra.mxu0 %v153
    %182 = vmatprep.subr.mxu0 0.0
    %183 = vmatpush1.msra.mxu0 %v154
    %184 = vmatprep.subr.mxu0 0.0
    %185 = vmatpush1.msra.mxu0 %v155
    %186 = vmatprep.subr.mxu0 0.0
    %187 = vmatpush1.msra.mxu0 %v156
    %188 = vmatprep.subr.mxu0 0.0
    %189 = vmatpush1.msra.mxu0 %v157
    %190 = vmatprep.subr.mxu0 0.0
    %191 = vmatpush1.msra.mxu0 %v158
    %192 = vmatprep.subr.mxu0 0.0
    %193 = vmatpush1.msra.mxu0 %v159
    %194 = vmatprep.subr.mxu0 0.0
    %195 = vmatpush1.msra.mxu0 %v160
    %196 = vmatprep.subr.mxu0 0.0
    %197 = vmatpush1.msra.mxu0 %v161
    %198 = vmatprep.subr.mxu0 0.0
    %199 = vmatpush1.msra.mxu0 %v162
    %200 = vmatprep.subr.mxu0 0.0
    %201 = vmatpush1.msra.mxu0 %v163
    %202 = vmatprep.subr.mxu0 0.0
    %203 = vmatpush1.msra.mxu0 %v164
    %204 = vmatprep.subr.mxu0 0.0
    %205 = vmatpush1.msra.mxu0 0.0
    %206 = vmatprep.subr.mxu0 0.0
    %207 = vmatpush1.msra.mxu0 0.0
    %208 = vmatprep.subr.mxu0 0.0
    %209 = vmatpush1.msra.mxu0 0.0
    %210 = vmatprep.subr.mxu0 0.0
    %211 = vmatpush1.msra.mxu0 0.0
    %212 = vmatprep.subr.mxu0 0.0
    %213 = vmatpush1.msra.mxu0 0.0
    %214 = vmatprep.subr.mxu0 0.0
    %215 = vmatpush1.msra.mxu0 0.0
    %216 = vmatprep.subr.mxu0 0.0
    %217 = vmatpush1.msra.mxu0 0.0
    %218 = vmatprep.subr.mxu0 0.0
    %219 = vmatpush1.msra.mxu0 0.0
    %220 = vmatprep.subr.mxu0 0.0
    %221 = vmatpush1.msra.mxu0 0.0
    %222 = vmatprep.subr.mxu0 0.0
    %223 = vmatpush1.msra.mxu0 0.0
    %224 = vmatprep.subr.mxu0 0.0
    %225 = vmatpush1.msra.mxu0 0.0
    %226 = vmatprep.subr.mxu0 0.0
    %227 = vmatpush1.msra.mxu0 0.0
    %228 = vmatprep.subr.mxu0 0.0
    %229 = vmatpush1.msra.mxu0 0.0
    %230 = vmatprep.subr.mxu0 0.0
    %231 = vmatpush1.msra.mxu0 0.0
    %232 = vmatprep.subr.mxu0 0.0
    %233 = vmatpush1.msra.mxu0 0.0
    %234 = vmatprep.subr.mxu0 0.0
    %235 = vmatpush1.msra.mxu0 0.0
    %236 = vmatprep.mubr.f32.mxu0 0.0
    %237 = vmatmul.mubr.f32.gmra.mrb[0].mxu0 %v148
    %v238 = vpop.f32.mrb[0].mxu0
    %v239 = vadd.f32 %v170, %v238
    %v240 = vpop.f32.mrb[0].mxu0
    %241 = vdwg.mxu0
    %242 = vst [vmem:[#allocation8] sm:$0xff] %v239
    // Predicated region
    $region34: #{tpu_custom_call.1} parent=1 // pred_check
      _
    $region35: #{tpu_custom_call.1} parent=1 // pred_check_branch
      %244 = sbr.rel (0) target = $region37
    $region36: #{tpu_custom_call.1} parent=1 // pred_region
      %s246 = ssub.s32 128, 128
      %247 = vsyncadd [#allocation4], %s246
      %s249 = sshll.u32 [#allocation8], 4
      %s250 = int_to_ptr.vmem [resolvable:$true] %s249
      %252 = dma.vmem_to_hbm [thread:$0]  %s250, 128, %s5, [#allocation4]
    $region37: #{tpu_custom_call.1} parent=1 // pred_fallthru
      _
    // Predicated region
    $region38: #{tpu_custom_call.1} parent=1 // pred_check
      _
    $region39: #{tpu_custom_call.1} parent=1 // pred_check_branch
      %254 = sbr.rel (0) target = $region41
    $region40: #{tpu_custom_call.1} parent=1 // pred_region
      %255 = dma.done [#allocation4], 128
    $region41: #{tpu_custom_call.1} parent=1 // pred_fallthru
      _
    %256 = vsyncpa [#allocation3], 1
    %257 = vsyncpa [#allocation6], 1
    %258 = vsyncpa [#allocation4], 1

</llo_original>
